<compile_context>
chip_gen: v7x
topology: tpu7x:2x2x1
jax: 0.10.0
libtpu: 0.0.40
codegen_flags: <defaults>
</compile_context>

<pallas_src>
import jax
import jax.numpy as jnp
from jax.experimental import pallas as pl
from jax.experimental.pallas import tpu as pltpu


# ----------------------------------------------------------------------------- kernel
def _odefunc_mlp_kernel(x_ref, w_ref, b_ref, o_ref):
    # x_ref: (TM, 128)  w_ref: (128, 128)  b_ref: (1, 128) f32  o_ref: (TM, 128)
    # negation is already folded into w_ref / b_ref by prepare_ode_block_params.
    x = x_ref[...].astype(w_ref.dtype)          # bf16 MXU path iff params are bf16
    z = jnp.dot(x, w_ref[...], preferred_element_type=jnp.float32)
    o_ref[...] = jnp.tanh(z + b_ref[...]).astype(o_ref.dtype)


# ----------------------------------------------------------------------------- helpers
def _round_up(a, m):
    return ((a + m - 1) // m) * m


def _sublane_granularity(*dtypes):
    """Minimum row-tile granularity so every non-full-array block keeps native
    (8,128)/(16,128)/(32,128) tiling -> unmasked lane-dense loads/stores."""
    g = 8
    for dt in dtypes:
        it = jnp.dtype(dt).itemsize
        if it == 2:
            g = max(g, 16)
        elif it == 1:
            g = max(g, 32)
    return g


def _tile_rows(packed, gran, tm_target=2048, split_threshold=512):
    """Pick (TM, grid_m) for `packed` 128-lane rows.

    - tiny/medium problems: one block equal to the full array (always a legal
      block shape, no ragged handling, no wasted rows).
    - larger problems: balanced tiles (last-block waste <= gran-1 rows) and an
      even grid so both v7x TensorCores get the same number of tiles.
    """
    if packed <= max(split_threshold, gran):
        return packed, 1
    grid_m = max(2, pl.cdiv(packed, tm_target))
    if grid_m % 2:
        grid_m += 1                               # even grid for v7x megacore
    tm = _round_up(pl.cdiv(packed, grid_m), gran)
    grid_m = pl.cdiv(packed, tm)                  # re-derive after rounding
    return tm, grid_m


# ----------------------------------------------------------------------------- params
def prepare_ode_block_params(w_t, b, param_dtype=jnp.float32):
    """One-time transform of the Linear parameters into the kernel's layout.

    w_t : [64, 64]  weight already transposed to [in, out] (i.e. PyTorch weight.T)
    b   : [64]      bias
    param_dtype : jnp.float32 (default) or jnp.bfloat16 (single bf16 MXU pass,
                  mainly useful on v5e; ~1e-2 relative rounding on inputs).

    Returns (w_big [128,128] param_dtype, b_big [1,128] f32) with the -1 of the
    ODE func folded in and the block-diagonal doubling for the 128-lane layout.
    Call once at weight-load time and reuse across solver steps.
    """
    D = b.shape[0]
    assert w_t.shape == (D, D) and D == 64, "this packed-lane kernel assumes fc_dim == 64"
    lanes = 2 * D
    w_neg = (-jnp.asarray(w_t, jnp.float32)).astype(param_dtype)
    b_neg = -jnp.asarray(b, jnp.float32)
    w_big = jnp.zeros((lanes, lanes), param_dtype)
    w_big = w_big.at[:D, :D].set(w_neg).at[D:, D:].set(w_neg)
    b_big = jnp.tile(b_neg, 2).reshape(1, lanes)          # bias stays f32 (post-dot add)
    return w_big, b_big


# ----------------------------------------------------------------------------- wrapper
def ode_block_temp(x, w_big, b_big, out_dtype=None):
    """Pallas ODEBlocktemp.forward == tanh(-(x @ W^T + b)).

    x      : [B, 64]  f32 or bf16 (pass bf16 end-to-end if the model runs bf16;
             do not cast in a wrapper, that costs an extra mem-bound XLA pass)
    w_big  : [128,128] prepared weight (prepare_ode_block_params)
    b_big  : [1,128]   prepared bias   (prepare_ode_block_params)
    out_dtype : optional output dtype (e.g. jnp.bfloat16 halves writeback bytes).
    """
    B, D = x.shape
    assert D == 64, "this packed-lane kernel assumes fc_dim == 64"
    lanes = 2 * D
    out_dtype = x.dtype if out_dtype is None else out_dtype

    # Pack pairs of 64-wide rows into one 128-lane row (free row-major reshape).
    # Only an odd batch pays a 1-row pad + trailing slice.
    odd = B % 2
    if odd:
        x = jnp.pad(x, ((0, 1), (0, 0)))
    b_even = B + odd
    packed = b_even // 2
    x2 = x.reshape(packed, lanes)

    gran = _sublane_granularity(x.dtype, out_dtype)
    tm, grid_m = _tile_rows(packed, gran)

    out2 = pl.pallas_call(
        _odefunc_mlp_kernel,
        out_shape=jax.ShapeDtypeStruct((packed, lanes), out_dtype),
        grid_spec=pltpu.PrefetchScalarGridSpec(
            num_scalar_prefetch=0,
            grid=(grid_m,),
            in_specs=[
                pl.BlockSpec((tm, lanes), lambda i: (i, 0)),        # x tile (ragged-OK)
                pl.BlockSpec((lanes, lanes), lambda i: (0, 0)),     # weight (resident)
                pl.BlockSpec((1, lanes), lambda i: (0, 0)),         # bias   (resident)
            ],
            out_specs=pl.BlockSpec((tm, lanes), lambda i: (i, 0)),
        ),
        compiler_params=pltpu.CompilerParams(
            dimension_semantics=("parallel",)),
    )(x2, w_big, b_big)

    out = out2.reshape(b_even, D)
    return out[:B] if odd else out


def ode_block_temp_from_linear(x, w_t, b, out_dtype=None, param_dtype=jnp.float32):
    """Convenience one-shot wrapper (prefer hoisting prepare_ode_block_params)."""
    w_big, b_big = prepare_ode_block_params(w_t, b, param_dtype=param_dtype)
    return ode_block_temp(x, w_big, b_big, out_dtype=out_dtype)


def ode_block_temp_ref(x, w_t, b):
    # pure-JAX reference for correctness checks
    return jnp.tanh(-(x @ w_t + b))


# ----------------------------------------------------------------------------- tests
if __name__ == "__main__":
    key = jax.random.PRNGKey(0)
    D = 64                                # fc_dim = 64 in the SODEF ODEfunc_mlp
    kx, kw, kb = jax.random.split(key, 3)

    # deterministic synthetic Linear params (PyTorch shape: weight [D_out, D_in])
    w = jax.random.normal(kw, (D, D), dtype=jnp.float32) * 0.05
    b = jax.random.normal(kb, (D,), dtype=jnp.float32) * 0.05
    w_t = w.T                             # [in, out] for x @ W^T

    # --- one-time param prep (hoisted out of the per-solver-step call) ---
    w_big, b_big = prepare_ode_block_params(w_t, b)

    # --- small batch, f32, single full-array block ---
    x = jax.random.normal(kx, (8, D), dtype=jnp.float32)
    out = jax.block_until_ready(ode_block_temp(x, w_big, b_big))
    ref = ode_block_temp_ref(x, w_t, b)
    assert out.shape == (8, D)
    assert jnp.allclose(out, ref, atol=1e-5, rtol=1e-5)

    # --- odd batch (exercises the 1-row pad + slice path) ---
    x_odd = x[:5]
    out_odd = jax.block_until_ready(ode_block_temp(x_odd, w_big, b_big))
    assert out_odd.shape == (5, D)
    assert jnp.allclose(out_odd, ode_block_temp_ref(x_odd, w_t, b), atol=1e-5, rtol=1e-5)

    # --- medium batch: even 2-step grid with a ragged (masked) last block ---
    x_big = jax.random.normal(kx, (1100, D), dtype=jnp.float32)
    out_big = jax.block_until_ready(ode_block_temp(x_big, w_big, b_big))
    assert out_big.shape == (1100, D)
    assert jnp.allclose(out_big, ode_block_temp_ref(x_big, w_t, b), atol=1e-4, rtol=1e-4)

    # --- bf16 writeback (halves HBM store bytes; relaxed tolerance) ---
    out_bf16 = jax.block_until_ready(ode_block_temp(x, w_big, b_big, out_dtype=jnp.bfloat16))
    assert out_bf16.dtype == jnp.bfloat16
    assert jnp.allclose(out_bf16.astype(jnp.float32), ref, atol=2e-2, rtol=2e-2)

    # --- optional bf16-compute path (single bf16 MXU pass; mainly for v5e) ---
    w_big_bf, b_big_bf = prepare_ode_block_params(w_t, b, param_dtype=jnp.bfloat16)
    out_bfc = jax.block_until_ready(ode_block_temp(x, w_big_bf, b_big_bf))
    assert jnp.allclose(out_bfc, ref, atol=2e-2, rtol=2e-2)

    print("KERNEL_OK")
</pallas_src>

<mosaic_0001>
module attributes {stable_mosaic.version = 11 : i64} {
  func.func @_odefunc_mlp_kernel(%arg0: i32, %arg1: memref<4x128xf32, #tpu.memory_space<vmem>>, %arg2: memref<128x128xf32, #tpu.memory_space<vmem>>, %arg3: memref<1x128xf32, #tpu.memory_space<vmem>>, %arg4: memref<4x128xf32, #tpu.memory_space<vmem>>) attributes {dimension_semantics = [#tpu.dimension_semantics<parallel>], iteration_bounds = array<i64: 1>, scalar_prefetch = 0 : i64, scratch_operands = 0 : i64, tpu.core_type = #tpu.core_type<tc>, window_params = [{transform_indices = @transform_0, window_bounds = array<i64: 4, 128>}, {pipeline_mode = #tpu.pipeline_mode<synchronous>, transform_indices = @transform_1, window_bounds = array<i64: 128, 128>}, {pipeline_mode = #tpu.pipeline_mode<synchronous>, transform_indices = @transform_2, window_bounds = array<i64: 1, 128>}, {transform_indices = @transform_3, window_bounds = array<i64: 4, 128>}]} {
    %c0 = arith.constant 0 : index
    %c0_0 = arith.constant 0 : index
    %0 = vector.load %arg1[%c0, %c0_0] : memref<4x128xf32, #tpu.memory_space<vmem>>, vector<4x128xf32>
    %c0_1 = arith.constant 0 : index
    %c0_2 = arith.constant 0 : index
    %1 = vector.load %arg2[%c0_1, %c0_2] : memref<128x128xf32, #tpu.memory_space<vmem>>, vector<128x128xf32>
    %cst = arith.constant dense<0.000000e+00> : vector<4x128xf32>
    %2 = tpu.matmul %0, %1, %cst {dimension_numbers = #tpu.dot_dimension_numbers<[1], [0], [0], [1], [0, 0, 1, 1], [], []>} : vector<4x128xf32>, vector<128x128xf32>, vector<4x128xf32> -> vector<4x128xf32>
    %c0_3 = arith.constant 0 : index
    %c0_4 = arith.constant 0 : index
    %3 = vector.load %arg3[%c0_3, %c0_4] : memref<1x128xf32, #tpu.memory_space<vmem>>, vector<1x128xf32>
    %4 = vector.broadcast %3 : vector<1x128xf32> to vector<4x128xf32>
    %5 = arith.addf %2, %4 : vector<4x128xf32>
    %6 = math.tanh %5 : vector<4x128xf32>
    %c0_5 = arith.constant 0 : index
    %c0_6 = arith.constant 0 : index
    %7 = vector.load %arg4[%c0_5, %c0_6] : memref<4x128xf32, #tpu.memory_space<vmem>>, vector<4x128xf32>
    tpu.vector_store %arg4[%c0_5, %c0_6], %6 {strides = array<i32>} : memref<4x128xf32, #tpu.memory_space<vmem>>, vector<4x128xf32>,
    return
  }
  func.func @transform_0(%arg0: i32) -> (i32, i32) {
    %c0_i32 = arith.constant 0 : i32
    %c0_i32_0 = arith.constant 0 : i32
    return %arg0, %c0_i32 : i32, i32
  }
  func.func @transform_1(%arg0: i32) -> (i32, i32) {
    %c0_i32 = arith.constant 0 : i32
    %c0_i32_0 = arith.constant 0 : i32
    %c0_i32_1 = arith.constant 0 : i32
    return %c0_i32, %c0_i32_0 : i32, i32
  }
  func.func @transform_2(%arg0: i32) -> (i32, i32) {
    %c0_i32 = arith.constant 0 : i32
    %c0_i32_0 = arith.constant 0 : i32
    %c0_i32_1 = arith.constant 0 : i32
    return %c0_i32, %c0_i32_0 : i32, i32
  }
  func.func @transform_3(%arg0: i32) -> (i32, i32) {
    %c0_i32 = arith.constant 0 : i32
    %c0_i32_0 = arith.constant 0 : i32
    return %arg0, %c0_i32 : i32, i32
  }
}

</mosaic_0001>

<llo_original>
// kernel: tpu_custom_call.1
$region0: #{tpu_custom_call.1}
  #allocation0 [shape = 'u32[]', space=smem, size = 0x4, offset = 0x4, fixed_abs, tag = 'smem constant byte address 0x4 - core index']
  #allocation1 [shape = 'u32[144,128]{1,0:T(1,128)}', space=vmem, size = 0x12000, scoped, tag = 'internal scratch']
  %s0 = inlined_call_operand.hbm [shape: f32[4,128], index: 0, kind: input, shape index: {}]
  %s1 = inlined_call_operand.hbm [shape: f32[128,128], index: 1, kind: input, shape index: {}]
  %s2 = inlined_call_operand.vmem [shape: f32[1,128], index: 2, kind: input, shape index: {}]
  %s3 = inlined_call_operand.hbm [shape: f32[4,128], index: 3, kind: output, shape index: {}]
  %s4 = sld [smem:[#allocation0]]
  $region30: #{tpu_custom_call.1} parent=0
    _
  %s6 = ssub.s32 1, %s4
  %s7 = scalar_select 0, %s6, %s4
  $region1: #{tpu_custom_call.1} parent=0
    #allocation2 [shape = 'u8[2048]{0}', space=vmem, size = 0x800, scoped, tag = 'input window, operand 0, single buffered']
    #allocation3 [shape = 's32[1]{0}', space=sflag, size = 0x4, scoped, tag = 'scoped memory for tpu_custom_call.1']
    #allocation4 [shape = 's32[1]{0}', space=sflag, size = 0x4, scoped, tag = 'scoped memory for tpu_custom_call.1']
    #allocation5 [shape = 'u8[65536]{0}', space=vmem, size = 0x10000, scoped, tag = 'input window, operand 1, single buffered']
    #allocation6 [shape = 's32[1]{0}', space=sflag, size = 0x4, scoped, tag = 'scoped memory for tpu_custom_call.1']
    #allocation7 [shape = 'u8[2048]{0}', space=vmem, size = 0x800, scoped, tag = 'output window, operand 0, single buffered']
    %8 = vsyncpa [#allocation3], 0
    %9 = vsyncpa [#allocation6], 0
    %10 = vsyncpa [#allocation4], 0
    // Predicated region
    $region2: #{tpu_custom_call.1} parent=1 // pred_check
      _
    $region3: #{tpu_custom_call.1} parent=1 // pred_check_branch
      %12 = sbr.rel (0) target = $region5
    $region4: #{tpu_custom_call.1} parent=1 // pred_region
      %s14 = ssub.s32 64, 64
      %15 = vsyncadd [#allocation3], %s14
      %s17 = sshll.u32 [#allocation2], 4
      %s18 = int_to_ptr.vmem [resolvable:$true] %s17
      %20 = dma.hbm_to_vmem [thread:$0]  %s0, 64, %s18, [#allocation3]
    $region5: #{tpu_custom_call.1} parent=1 // pred_fallthru
      _
    // Predicated region
    $region6: #{tpu_custom_call.1} parent=1 // pred_check
      _
    $region7: #{tpu_custom_call.1} parent=1 // pred_check_branch
      %22 = sbr.rel (0) target = $region9
    $region8: #{tpu_custom_call.1} parent=1 // pred_region
      %s24 = ssub.s32 2048, 2048
      %25 = vsyncadd [#allocation6], %s24
      %s26 = sshll.u32 [#allocation5], 4
      %s27 = int_to_ptr.vmem [resolvable:$true] %s26
      %32 = dma.hbm_to_vmem [thread:$0]  %s1, 2048, %s27, [#allocation6], 128, 128, 8
    $region9: #{tpu_custom_call.1} parent=1 // pred_fallthru
      _
    // Predicated region
    $region10: #{tpu_custom_call.1} parent=1 // pred_check
      _
    $region11: #{tpu_custom_call.1} parent=1 // pred_check_branch
      %34 = sbr.rel (0) target = $region13
    $region12: #{tpu_custom_call.1} parent=1 // pred_region
      _
    $region13: #{tpu_custom_call.1} parent=1 // pred_fallthru
      _
    // Predicated region
    $region14: #{tpu_custom_call.1} parent=1 // pred_check
      _
    $region15: #{tpu_custom_call.1} parent=1 // pred_check_branch
      %36 = sbr.rel (0) target = $region17
    $region16: #{tpu_custom_call.1} parent=1 // pred_region
      %37 = dma.done [#allocation3], 64
    $region17: #{tpu_custom_call.1} parent=1 // pred_fallthru
      _
    // Predicated region
    $region18: #{tpu_custom_call.1} parent=1 // pred_check
      _
    $region19: #{tpu_custom_call.1} parent=1 // pred_check_branch
      %39 = sbr.rel (0) target = $region21
    $region20: #{tpu_custom_call.1} parent=1 // pred_region
      %40 = dma.done [#allocation6], 2048
    $region21: #{tpu_custom_call.1} parent=1 // pred_fallthru
      _
    %v41 = vld [vmem:[#allocation2] sm:$0xf]
    %v42 = vld [vmem:[#allocation5] sm:$0xff]
    %v43 = vld [vmem:[#allocation5 + $0x8] sm:$0xff]
    %v44 = vld [vmem:[#allocation5 + $0x10] sm:$0xff]
    %v45 = vld [vmem:[#allocation5 + $0x18] sm:$0xff]
    %v46 = vld [vmem:[#allocation5 + $0x20] sm:$0xff]
    %v47 = vld [vmem:[#allocation5 + $0x28] sm:$0xff]
    %v48 = vld [vmem:[#allocation5 + $0x30] sm:$0xff]
    %v49 = vld [vmem:[#allocation5 + $0x38] sm:$0xff]
    %v50 = vld [vmem:[#allocation5 + $0x40] sm:$0xff]
    %v51 = vld [vmem:[#allocation5 + $0x48] sm:$0xff]
    %v52 = vld [vmem:[#allocation5 + $0x50] sm:$0xff]
    %v53 = vld [vmem:[#allocation5 + $0x58] sm:$0xff]
    %v54 = vld [vmem:[#allocation5 + $0x60] sm:$0xff]
    %v55 = vld [vmem:[#allocation5 + $0x68] sm:$0xff]
    %v56 = vld [vmem:[#allocation5 + $0x70] sm:$0xff]
    %v57 = vld [vmem:[#allocation5 + $0x78] sm:$0xff]
    %v58 = vld [vmem:[%s2] sm:$0x1]
    %v60 = vlaneseq
    %v61 = vshrl.u32 %v60, 7
    %v62 = vsub.s32 0, %v61
    %v63 = vrot.slane %v58, %v62
    %65 = vmatprep.subr.mxu0 0.0
    %66 = vmatpush1.msra.mxu0 %v42
    %67 = vmatprep.subr.mxu0 0.0
    %68 = vmatpush1.msra.mxu0 %v43
    %69 = vmatprep.subr.mxu0 0.0
    %70 = vmatpush1.msra.mxu0 %v44
    %71 = vmatprep.subr.mxu0 0.0
    %72 = vmatpush1.msra.mxu0 %v45
    %73 = vmatprep.subr.mxu0 0.0
    %74 = vmatpush1.msra.mxu0 %v46
    %75 = vmatprep.subr.mxu0 0.0
    %76 = vmatpush1.msra.mxu0 %v47
    %77 = vmatprep.subr.mxu0 0.0
    %78 = vmatpush1.msra.mxu0 %v48
    %79 = vmatprep.subr.mxu0 0.0
    %80 = vmatpush1.msra.mxu0 %v49
    %81 = vmatprep.subr.mxu0 0.0
    %82 = vmatpush1.msra.mxu0 %v50
    %83 = vmatprep.subr.mxu0 0.0
    %84 = vmatpush1.msra.mxu0 %v51
    %85 = vmatprep.subr.mxu0 0.0
    %86 = vmatpush1.msra.mxu0 %v52
    %87 = vmatprep.subr.mxu0 0.0
    %88 = vmatpush1.msra.mxu0 %v53
    %89 = vmatprep.subr.mxu0 0.0
    %90 = vmatpush1.msra.mxu0 %v54
    %91 = vmatprep.subr.mxu0 0.0
    %92 = vmatpush1.msra.mxu0 %v55
    %93 = vmatprep.subr.mxu0 0.0
    %94 = vmatpush1.msra.mxu0 %v56
    %95 = vmatprep.subr.mxu0 0.0
    %96 = vmatpush1.msra.mxu0 %v57
    %97 = vmatprep.subr.mxu0 0.0
    %98 = vmatpush1.msra.mxu0 0.0
    %99 = vmatprep.subr.mxu0 0.0
    %100 = vmatpush1.msra.mxu0 0.0
    %101 = vmatprep.subr.mxu0 0.0
    %102 = vmatpush1.msra.mxu0 0.0
    %103 = vmatprep.subr.mxu0 0.0
    %104 = vmatpush1.msra.mxu0 0.0
    %105 = vmatprep.subr.mxu0 0.0
    %106 = vmatpush1.msra.mxu0 0.0
    %107 = vmatprep.subr.mxu0 0.0
    %108 = vmatpush1.msra.mxu0 0.0
    %109 = vmatprep.subr.mxu0 0.0
    %110 = vmatpush1.msra.mxu0 0.0
    %111 = vmatprep.subr.mxu0 0.0
    %112 = vmatpush1.msra.mxu0 0.0
    %113 = vmatprep.subr.mxu0 0.0
    %114 = vmatpush1.msra.mxu0 0.0
    %115 = vmatprep.subr.mxu0 0.0
    %116 = vmatpush1.msra.mxu0 0.0
    %117 = vmatprep.subr.mxu0 0.0
    %118 = vmatpush1.msra.mxu0 0.0
    %119 = vmatprep.subr.mxu0 0.0
    %120 = vmatpush1.msra.mxu0 0.0
    %121 = vmatprep.subr.mxu0 0.0
    %122 = vmatpush1.msra.mxu0 0.0
    %123 = vmatprep.subr.mxu0 0.0
    %124 = vmatpush1.msra.mxu0 0.0
    %125 = vmatprep.subr.mxu0 0.0
    %126 = vmatpush1.msra.mxu0 0.0
    %127 = vmatprep.subr.mxu0 0.0
    %128 = vmatpush1.msra.mxu0 0.0
    %129 = vmatprep.mubr.f32.mxu0 0.0
    %130 = vmatmul.mubr.f32.gmra.mrb[0].mxu0 %v41
    %v131 = vpop.f32.mrb[0].mxu0
    %v132 = vadd.f32 %v63, %v131
    %v133 = vpop.f32.mrb[0].mxu0
    %134 = vdwg.mxu0
    %v135 = vtanh.pop %v132
    %136 = vst [vmem:[#allocation7] sm:$0xf] %v135
    // Predicated region
    $region22: #{tpu_custom_call.1} parent=1 // pred_check
      _
    $region23: #{tpu_custom_call.1} parent=1 // pred_check_branch
      %138 = sbr.rel (0) target = $region25
    $region24: #{tpu_custom_call.1} parent=1 // pred_region
      %s140 = ssub.s32 64, 64
      %141 = vsyncadd [#allocation4], %s140
      %s143 = sshll.u32 [#allocation7], 4
      %s144 = int_to_ptr.vmem [resolvable:$true] %s143
      %146 = dma.vmem_to_hbm [thread:$0]  %s144, 64, %s3, [#allocation4]
    $region25: #{tpu_custom_call.1} parent=1 // pred_fallthru
      _
    // Predicated region
    $region26: #{tpu_custom_call.1} parent=1 // pred_check
      _
    $region27: #{tpu_custom_call.1} parent=1 // pred_check_branch
      %148 = sbr.rel (0) target = $region29
    $region28: #{tpu_custom_call.1} parent=1 // pred_region
      %149 = dma.done [#allocation4], 64
    $region29: #{tpu_custom_call.1} parent=1 // pred_fallthru
      _
    %150 = vsyncpa [#allocation3], 1
    %151 = vsyncpa [#allocation6], 1
    %152 = vsyncpa [#allocation4], 1

</llo_original>
